<compile_context>
chip_gen: v7x
topology: tpu7x:2x2x1
jax: 0.10.0
libtpu: 0.0.40
codegen_flags: <defaults>
</compile_context>

<pallas_src>
import functools

import jax
import jax.numpy as jnp
from jax import lax
from jax.experimental import pallas as pl
from jax.experimental.pallas import tpu as pltpu

EPS = 1e-3       # nn.BatchNorm1d(out_channels, eps=0.001)
LANE = 128       # TPU lane width
SUBLANE = 8      # TPU sublane count (f32)


def _round_up(x, m):
    return (x + m - 1) // m * m


def basicfc_kernel(x_ref, w_ref, gamma_ref, beta_ref, o_ref, *, n_true):
    # x: (N_p, C_in_p)  w: (C_in_p, TN)  gamma/beta: (1, TN)  o: (N_p, TN)
    # Linear (bias omitted — it cancels exactly under batch-stat BN).
    y = jnp.dot(x_ref[...], w_ref[...], preferred_element_type=jnp.float32)

    # BatchNorm1d, training-mode batch statistics (biased variance).
    # Padded batch rows are exact zeros, so sums over the padded axis equal
    # sums over the true batch; divide by the true batch size.
    inv_n = 1.0 / n_true
    s1 = jnp.sum(y, axis=0, keepdims=True) * inv_n          # E[y]   (XLU reduce)
    s2 = jnp.sum(y * y, axis=0, keepdims=True) * inv_n      # E[y^2] (XLU reduce)
    var = s2 - s1 * s1
    inv_std = lax.rsqrt(var + EPS)                           # EUP

    scale = gamma_ref[...] * inv_std
    shift = beta_ref[...] - s1 * scale
    out = y * scale + shift

    # ReLU; padded rows/channels are garbage but sliced off by the wrapper.
    o_ref[...] = jnp.maximum(out, 0.0).astype(o_ref.dtype)


@jax.jit
def basic_fc(x, w_t, gamma, beta):
    """x: (N, C_in) f32; w_t: (C_in, C_out) pre-transposed Linear weight;
    gamma/beta: (C_out,) BatchNorm affine parameters."""
    n, c_in = x.shape
    c_out = w_t.shape[1]

    n_p = _round_up(max(n, SUBLANE), SUBLANE)
    c_in_p = _round_up(c_in, LANE)
    c_out_p = _round_up(c_out, LANE)

    # Channel tile: 256 matches the v6e/v7x MXU width; 128 is v5e-native and
    # the fallback for small layers.
    tn = 256 if c_out_p % 256 == 0 else 128

    # Zero-pad to dense vreg shapes. Padded x rows / W columns give y == 0.
    x_p = jnp.pad(x, ((0, n_p - n), (0, c_in_p - c_in)))
    w_p = jnp.pad(w_t, ((0, c_in_p - c_in), (0, c_out_p - c_out)))
    g_p = jnp.pad(gamma.reshape(1, c_out), ((0, 0), (0, c_out_p - c_out)))
    b_p = jnp.pad(beta.reshape(1, c_out), ((0, 0), (0, c_out_p - c_out)))

    grid = (c_out_p // tn,)

    # Rough double-buffered f32 VMEM footprint with headroom, capped for v7x.
    vmem_needed = 2 * 4 * (n_p * c_in_p + c_in_p * tn + 2 * tn + n_p * tn)
    vmem_limit = int(min(max(2 * vmem_needed, 16 * 1024 * 1024),
                         64 * 1024 * 1024))

    kernel = functools.partial(basicfc_kernel, n_true=n)

    out_p = pl.pallas_call(
        kernel,
        out_shape=jax.ShapeDtypeStruct((n_p, c_out_p), jnp.float32),
        grid_spec=pltpu.PrefetchScalarGridSpec(
            num_scalar_prefetch=0,
            grid=grid,
            in_specs=[
                pl.BlockSpec((n_p, c_in_p), lambda j: (0, 0)),   # x: VMEM-resident
                pl.BlockSpec((c_in_p, tn), lambda j: (0, j)),    # weight tile
                pl.BlockSpec((1, tn), lambda j: (0, j)),         # gamma tile
                pl.BlockSpec((1, tn), lambda j: (0, j)),         # beta tile
            ],
            out_specs=pl.BlockSpec((n_p, tn), lambda j: (0, j)),
        ),
        compiler_params=pltpu.CompilerParams(
            dimension_semantics=("parallel",),   # channel tiles independent
            vmem_limit_bytes=vmem_limit,
        ),
    )(x_p, w_p, g_p, b_p)

    return out_p[:n, :c_out]


def reference(x, weight, bias, gamma, beta):
    # Full PyTorch-semantics forward (bias included) for checking.
    y = x @ weight.T + bias
    mean = jnp.mean(y, axis=0, keepdims=True)
    var = jnp.mean((y - mean) ** 2, axis=0, keepdims=True)
    y_hat = (y - mean) / jnp.sqrt(var + EPS)
    return jnp.maximum(y_hat * gamma + beta, 0.0)


if __name__ == "__main__":
    key = jax.random.PRNGKey(0)
    # N deliberately not a sublane multiple to exercise the batch-padding path.
    N, C_IN, C_OUT = 12, 16, 32

    kx, kw, kb = jax.random.split(key, 3)
    x = jax.random.normal(kx, (N, C_IN), dtype=jnp.float32)

    # Deterministic parameter init (PyTorch Linear-style uniform bound).
    bound = 1.0 / (C_IN ** 0.5)
    weight = jax.random.uniform(kw, (C_OUT, C_IN), jnp.float32, -bound, bound)
    bias = jax.random.uniform(kb, (C_OUT,), jnp.float32, -bound, bound)
    gamma = jnp.ones((C_OUT,), jnp.float32)   # BatchNorm weight
    beta = jnp.zeros((C_OUT,), jnp.float32)   # BatchNorm bias

    # Weight is stored pre-transposed once at "init" time (one-time cost, not
    # paid per forward call); the Linear bias is not passed to the kernel
    # because it cancels exactly under train-mode BatchNorm.
    w_t = weight.T

    out = basic_fc(x, w_t, gamma, beta)
    jax.block_until_ready(out)

    ref = reference(x, weight, bias, gamma, beta)
    assert out.shape == (N, C_OUT)
    assert jnp.allclose(out, ref, atol=1e-4, rtol=1e-4)

    print("KERNEL_OK")
</pallas_src>

<mosaic_0001>
module attributes {stable_mosaic.version = 11 : i64} {
  func.func @basicfc_kernel(%arg0: i32, %arg1: memref<16x128xf32, #tpu.memory_space<vmem>>, %arg2: memref<128x128xf32, #tpu.memory_space<vmem>>, %arg3: memref<1x128xf32, #tpu.memory_space<vmem>>, %arg4: memref<1x128xf32, #tpu.memory_space<vmem>>, %arg5: memref<16x128xf32, #tpu.memory_space<vmem>>) attributes {dimension_semantics = [#tpu.dimension_semantics<parallel>], iteration_bounds = array<i64: 1>, scalar_prefetch = 0 : i64, scratch_operands = 0 : i64, tpu.core_type = #tpu.core_type<tc>, window_params = [{pipeline_mode = #tpu.pipeline_mode<synchronous>, transform_indices = @transform_0, window_bounds = array<i64: 16, 128>}, {transform_indices = @transform_1, window_bounds = array<i64: 128, 128>}, {transform_indices = @transform_2, window_bounds = array<i64: 1, 128>}, {transform_indices = @transform_3, window_bounds = array<i64: 1, 128>}, {transform_indices = @transform_4, window_bounds = array<i64: 16, 128>}]} {
    %c0 = arith.constant 0 : index
    %c0_0 = arith.constant 0 : index
    %0 = vector.load %arg1[%c0, %c0_0] : memref<16x128xf32, #tpu.memory_space<vmem>>, vector<16x128xf32>
    %c0_1 = arith.constant 0 : index
    %c0_2 = arith.constant 0 : index
    %1 = vector.load %arg2[%c0_1, %c0_2] : memref<128x128xf32, #tpu.memory_space<vmem>>, vector<128x128xf32>
    %cst = arith.constant dense<0.000000e+00> : vector<16x128xf32>
    %2 = tpu.matmul %0, %1, %cst {dimension_numbers = #tpu.dot_dimension_numbers<[1], [0], [0], [1], [0, 0, 1, 1], [], []>} : vector<16x128xf32>, vector<128x128xf32>, vector<16x128xf32> -> vector<16x128xf32>
    %cst_3 = arith.constant dense<0.000000e+00> : vector<128xf32>
    %3 = vector.multi_reduction <add>, %2, %cst_3 [0] : vector<16x128xf32> to vector<128xf32>
    %4 = vector.shape_cast %3 : vector<128xf32> to vector<1x128xf32>
    %cst_4 = arith.constant 0.0833333358 : f32
    %5 = vector.broadcast %cst_4 : f32 to vector<1x128xf32>
    %6 = arith.mulf %4, %5 : vector<1x128xf32>
    %7 = arith.mulf %2, %2 : vector<16x128xf32>
    %cst_5 = arith.constant dense<0.000000e+00> : vector<128xf32>
    %8 = vector.multi_reduction <add>, %7, %cst_5 [0] : vector<16x128xf32> to vector<128xf32>
    %9 = vector.shape_cast %8 : vector<128xf32> to vector<1x128xf32>
    %cst_6 = arith.constant 0.0833333358 : f32
    %10 = vector.broadcast %cst_6 : f32 to vector<1x128xf32>
    %11 = arith.mulf %9, %10 : vector<1x128xf32>
    %12 = arith.mulf %6, %6 : vector<1x128xf32>
    %13 = arith.subf %11, %12 : vector<1x128xf32>
    %cst_7 = arith.constant 1.000000e-03 : f32
    %14 = vector.broadcast %cst_7 : f32 to vector<1x128xf32>
    %15 = arith.addf %13, %14 : vector<1x128xf32>
    %16 = math.rsqrt %15 : vector<1x128xf32>
    %c0_8 = arith.constant 0 : index
    %c0_9 = arith.constant 0 : index
    %17 = vector.load %arg3[%c0_8, %c0_9] : memref<1x128xf32, #tpu.memory_space<vmem>>, vector<1x128xf32>
    %18 = arith.mulf %17, %16 : vector<1x128xf32>
    %c0_10 = arith.constant 0 : index
    %c0_11 = arith.constant 0 : index
    %19 = vector.load %arg4[%c0_10, %c0_11] : memref<1x128xf32, #tpu.memory_space<vmem>>, vector<1x128xf32>
    %20 = arith.mulf %6, %18 : vector<1x128xf32>
    %21 = arith.subf %19, %20 : vector<1x128xf32>
    %22 = vector.broadcast %18 : vector<1x128xf32> to vector<16x128xf32>
    %23 = arith.mulf %2, %22 : vector<16x128xf32>
    %24 = vector.broadcast %21 : vector<1x128xf32> to vector<16x128xf32>
    %25 = arith.addf %23, %24 : vector<16x128xf32>
    %cst_12 = arith.constant 0.000000e+00 : f32
    %26 = vector.broadcast %cst_12 : f32 to vector<16x128xf32>
    %27 = arith.maximumf %25, %26 : vector<16x128xf32>
    %c0_13 = arith.constant 0 : index
    %c0_14 = arith.constant 0 : index
    %28 = vector.load %arg5[%c0_13, %c0_14] : memref<16x128xf32, #tpu.memory_space<vmem>>, vector<16x128xf32>
    tpu.vector_store %arg5[%c0_13, %c0_14], %27 {strides = array<i32>} : memref<16x128xf32, #tpu.memory_space<vmem>>, vector<16x128xf32>,
    return
  }
  func.func @transform_0(%arg0: i32) -> (i32, i32) {
    %c0_i32 = arith.constant 0 : i32
    %c0_i32_0 = arith.constant 0 : i32
    %c0_i32_1 = arith.constant 0 : i32
    return %c0_i32, %c0_i32_0 : i32, i32
  }
  func.func @transform_1(%arg0: i32) -> (i32, i32) {
    %c0_i32 = arith.constant 0 : i32
    %c0_i32_0 = arith.constant 0 : i32
    return %c0_i32, %arg0 : i32, i32
  }
  func.func @transform_2(%arg0: i32) -> (i32, i32) {
    %c0_i32 = arith.constant 0 : i32
    %c0_i32_0 = arith.constant 0 : i32
    return %c0_i32, %arg0 : i32, i32
  }
  func.func @transform_3(%arg0: i32) -> (i32, i32) {
    %c0_i32 = arith.constant 0 : i32
    %c0_i32_0 = arith.constant 0 : i32
    return %c0_i32, %arg0 : i32, i32
  }
  func.func @transform_4(%arg0: i32) -> (i32, i32) {
    %c0_i32 = arith.constant 0 : i32
    %c0_i32_0 = arith.constant 0 : i32
    return %c0_i32, %arg0 : i32, i32
  }
}

</mosaic_0001>

<llo_original>
// kernel: basic_fc.1
$region0: #{basic_fc.1}
  #allocation0 [shape = 'u32[]', space=smem, size = 0x4, offset = 0x4, fixed_abs, tag = 'smem constant byte address 0x4 - core index']
  #allocation1 [shape = 'u32[144,128]{1,0:T(1,128)}', space=vmem, size = 0x12000, scoped, tag = 'internal scratch']
  %s0 = inlined_call_operand.vmem [shape: f32[16,128], index: 0, kind: input, shape index: {}]
  %s1 = inlined_call_operand.vmem [shape: f32[128,128], index: 1, kind: input, shape index: {}]
  %s2 = inlined_call_operand.vmem [shape: f32[1,128], index: 2, kind: input, shape index: {}]
  %s3 = inlined_call_operand.vmem [shape: f32[1,128], index: 3, kind: input, shape index: {}]
  %s4 = inlined_call_operand.hbm [shape: f32[16,128], index: 4, kind: output, shape index: {}]
  %s5 = sld [smem:[#allocation0]]
  $region26: #{basic_fc.1} parent=0
    _
  %s7 = ssub.s32 1, %s5
  %s8 = scalar_select 0, %s7, %s5
  $region1: #{basic_fc.1} parent=0
    #allocation2 [shape = 'u8[8192]{0}', space=vmem, size = 0x2000, scoped, tag = 'output window, operand 0, single buffered']
    #allocation3 [shape = 's32[1]{0}', space=sflag, size = 0x4, scoped, tag = 'scoped memory for basic_fc.1']
    %9 = vsyncpa [#allocation3], 0
    // Predicated region
    $region2: #{basic_fc.1} parent=1 // pred_check
      _
    $region3: #{basic_fc.1} parent=1 // pred_check_branch
      %11 = sbr.rel (0) target = $region5
    $region4: #{basic_fc.1} parent=1 // pred_region
      _
    $region5: #{basic_fc.1} parent=1 // pred_fallthru
      _
    // Predicated region
    $region6: #{basic_fc.1} parent=1 // pred_check
      _
    $region7: #{basic_fc.1} parent=1 // pred_check_branch
      %13 = sbr.rel (0) target = $region9
    $region8: #{basic_fc.1} parent=1 // pred_region
      _
    $region9: #{basic_fc.1} parent=1 // pred_fallthru
      _
    // Predicated region
    $region10: #{basic_fc.1} parent=1 // pred_check
      _
    $region11: #{basic_fc.1} parent=1 // pred_check_branch
      %15 = sbr.rel (0) target = $region13
    $region12: #{basic_fc.1} parent=1 // pred_region
      _
    $region13: #{basic_fc.1} parent=1 // pred_fallthru
      _
    // Predicated region
    $region14: #{basic_fc.1} parent=1 // pred_check
      _
    $region15: #{basic_fc.1} parent=1 // pred_check_branch
      %17 = sbr.rel (0) target = $region17
    $region16: #{basic_fc.1} parent=1 // pred_region
      _
    $region17: #{basic_fc.1} parent=1 // pred_fallthru
      _
    %v18 = vld [vmem:[%s0] sm:$0xff]
    %v19 = vld [vmem:[%s0 + $0x8] sm:$0xff]
    %v20 = vld [vmem:[%s1] sm:$0xff]
    %v21 = vld [vmem:[%s1 + $0x8] sm:$0xff]
    %v22 = vld [vmem:[%s1 + $0x10] sm:$0xff]
    %v23 = vld [vmem:[%s1 + $0x18] sm:$0xff]
    %v24 = vld [vmem:[%s1 + $0x20] sm:$0xff]
    %v25 = vld [vmem:[%s1 + $0x28] sm:$0xff]
    %v26 = vld [vmem:[%s1 + $0x30] sm:$0xff]
    %v27 = vld [vmem:[%s1 + $0x38] sm:$0xff]
    %v28 = vld [vmem:[%s1 + $0x40] sm:$0xff]
    %v29 = vld [vmem:[%s1 + $0x48] sm:$0xff]
    %v30 = vld [vmem:[%s1 + $0x50] sm:$0xff]
    %v31 = vld [vmem:[%s1 + $0x58] sm:$0xff]
    %v32 = vld [vmem:[%s1 + $0x60] sm:$0xff]
    %v33 = vld [vmem:[%s1 + $0x68] sm:$0xff]
    %v34 = vld [vmem:[%s1 + $0x70] sm:$0xff]
    %v35 = vld [vmem:[%s1 + $0x78] sm:$0xff]
    %36 = vmatprep.subr.mxu0 0.0
    %37 = vmatpush1.msra.mxu0 %v20
    %38 = vmatprep.subr.mxu0 0.0
    %39 = vmatpush1.msra.mxu0 %v21
    %40 = vmatprep.subr.mxu0 0.0
    %41 = vmatpush1.msra.mxu0 %v22
    %42 = vmatprep.subr.mxu0 0.0
    %43 = vmatpush1.msra.mxu0 %v23
    %44 = vmatprep.subr.mxu0 0.0
    %45 = vmatpush1.msra.mxu0 %v24
    %46 = vmatprep.subr.mxu0 0.0
    %47 = vmatpush1.msra.mxu0 %v25
    %48 = vmatprep.subr.mxu0 0.0
    %49 = vmatpush1.msra.mxu0 %v26
    %50 = vmatprep.subr.mxu0 0.0
    %51 = vmatpush1.msra.mxu0 %v27
    %52 = vmatprep.subr.mxu0 0.0
    %53 = vmatpush1.msra.mxu0 %v28
    %54 = vmatprep.subr.mxu0 0.0
    %55 = vmatpush1.msra.mxu0 %v29
    %56 = vmatprep.subr.mxu0 0.0
    %57 = vmatpush1.msra.mxu0 %v30
    %58 = vmatprep.subr.mxu0 0.0
    %59 = vmatpush1.msra.mxu0 %v31
    %60 = vmatprep.subr.mxu0 0.0
    %61 = vmatpush1.msra.mxu0 %v32
    %62 = vmatprep.subr.mxu0 0.0
    %63 = vmatpush1.msra.mxu0 %v33
    %64 = vmatprep.subr.mxu0 0.0
    %65 = vmatpush1.msra.mxu0 %v34
    %66 = vmatprep.subr.mxu0 0.0
    %67 = vmatpush1.msra.mxu0 %v35
    %68 = vmatprep.subr.mxu0 0.0
    %69 = vmatpush1.msra.mxu0 0.0
    %70 = vmatprep.subr.mxu0 0.0
    %71 = vmatpush1.msra.mxu0 0.0
    %72 = vmatprep.subr.mxu0 0.0
    %73 = vmatpush1.msra.mxu0 0.0
    %74 = vmatprep.subr.mxu0 0.0
    %75 = vmatpush1.msra.mxu0 0.0
    %76 = vmatprep.subr.mxu0 0.0
    %77 = vmatpush1.msra.mxu0 0.0
    %78 = vmatprep.subr.mxu0 0.0
    %79 = vmatpush1.msra.mxu0 0.0
    %80 = vmatprep.subr.mxu0 0.0
    %81 = vmatpush1.msra.mxu0 0.0
    %82 = vmatprep.subr.mxu0 0.0
    %83 = vmatpush1.msra.mxu0 0.0
    %84 = vmatprep.subr.mxu0 0.0
    %85 = vmatpush1.msra.mxu0 0.0
    %86 = vmatprep.subr.mxu0 0.0
    %87 = vmatpush1.msra.mxu0 0.0
    %88 = vmatprep.subr.mxu0 0.0
    %89 = vmatpush1.msra.mxu0 0.0
    %90 = vmatprep.subr.mxu0 0.0
    %91 = vmatpush1.msra.mxu0 0.0
    %92 = vmatprep.subr.mxu0 0.0
    %93 = vmatpush1.msra.mxu0 0.0
    %94 = vmatprep.subr.mxu0 0.0
    %95 = vmatpush1.msra.mxu0 0.0
    %96 = vmatprep.subr.mxu0 0.0
    %97 = vmatpush1.msra.mxu0 0.0
    %98 = vmatprep.subr.mxu0 0.0
    %99 = vmatpush1.msra.mxu0 0.0
    %100 = vmatprep.mubr.f32.mxu0 0.0
    %101 = vmatmul.mubr.f32.gmra.mrb[0].mxu0 %v18
    %v102 = vpop.f32.mrb[0].mxu0
    %v103 = vadd.f32 0.0, %v102
    %v104 = vpop.f32.mrb[0].mxu0
    %105 = vmatprep.mubr.f32.mxu0 0.0
    %106 = vmatmul.mubr.f32.gmra.mrb[0].mxu0 %v19
    %v107 = vpop.f32.mrb[0].mxu0
    %v108 = vadd.f32 0.0, %v107
    %v109 = vpop.f32.mrb[0].mxu0
    %110 = vdwg.mxu0
    %v111 = vadd.f32 %v103, %v108
    %v112 = vrot.slane %v111, 4
    %v113 = vadd.f32 %v111, %v112
    %v114 = vrot.slane %v113, 2
    %v115 = vadd.f32 %v113, %v114
    %v116 = vrot.slane %v115, 1
    %v117 = vadd.f32 %v115, %v116
    %v118 = vmul.f32 %v117, 0.083333336
    %v119 = vmul.f32 %v103, %v103
    %v120 = vmul.f32 %v108, %v108
    %v121 = vadd.f32 %v119, %v120
    %v122 = vrot.slane %v121, 4
    %v123 = vadd.f32 %v121, %v122
    %v124 = vrot.slane %v123, 2
    %v125 = vadd.f32 %v123, %v124
    %v126 = vrot.slane %v125, 1
    %v127 = vadd.f32 %v125, %v126
    %v128 = vmul.f32 %v127, 0.083333336
    %v129 = vmul.f32 %v118, %v118
    %v130 = vsub.f32 %v128, %v129
    %v131 = vadd.f32 %v130, 0.001
    %v132 = vrsqrt.pop %v131
    %v133 = vld [vmem:[%s2] sm:$0x1]
    %v134 = vmul.f32 %v133, %v132
    %v135 = vld [vmem:[%s3] sm:$0x1]
    %v136 = vmul.f32 %v118, %v134
    %v137 = vsub.f32 %v135, %v136
    %v139 = vlaneseq
    %v140 = vshrl.u32 %v139, 7
    %v141 = vsub.s32 0, %v140
    %v142 = vrot.slane %v134, %v141
    %v144 = vmul.f32 %v103, %v142
    %v145 = vmul.f32 %v108, %v142
    %v147 = vlaneseq
    %v148 = vshrl.u32 %v147, 7
    %v149 = vsub.s32 0, %v148
    %v150 = vrot.slane %v137, %v149
    %v152 = vadd.f32 %v144, %v150
    %v153 = vadd.f32 %v145, %v150
    %v154 = vmax.f32 %v152, 0.0
    %v155 = vmax.f32 %v153, 0.0
    %156 = vst [vmem:[#allocation2] sm:$0xff] %v154
    %157 = vst [vmem:[#allocation2 + $0x8] sm:$0xff] %v155
    // Predicated region
    $region18: #{basic_fc.1} parent=1 // pred_check
      _
    $region19: #{basic_fc.1} parent=1 // pred_check_branch
      %159 = sbr.rel (0) target = $region21
    $region20: #{basic_fc.1} parent=1 // pred_region
      %s161 = ssub.s32 256, 256
      %162 = vsyncadd [#allocation3], %s161
      %s163 = sshll.u32 [#allocation2], 4
      %s164 = int_to_ptr.vmem [resolvable:$true] %s163
      %169 = dma.vmem_to_hbm [thread:$0]  %s164, 256, %s4, [#allocation3], 128, 128, 8
    $region21: #{basic_fc.1} parent=1 // pred_fallthru
      _
    // Predicated region
    $region22: #{basic_fc.1} parent=1 // pred_check
      _
    $region23: #{basic_fc.1} parent=1 // pred_check_branch
      %171 = sbr.rel (0) target = $region25
    $region24: #{basic_fc.1} parent=1 // pred_region
      %172 = dma.done [#allocation3], 256
    $region25: #{basic_fc.1} parent=1 // pred_fallthru
      _
    %173 = vsyncpa [#allocation3], 1

</llo_original>
